<compile_context>
chip_gen: v6e
topology: v6e:2x2x1
jax: 0.10.0
libtpu: 0.0.40
codegen_flags: <defaults>
</compile_context>

<pallas_src>
import jax
import jax.numpy as jnp
from jax.experimental import pallas as pl
from jax.experimental.pallas import tpu as pltpu


# Logical (PyTorch) layer sizes and their padded counterparts.
# Layer 1 keeps K unpadded (400 is a multiple of the bf16 sublane pack of 16).
_DIMS = [(400, 200), (200, 100), (100, 50), (50, 10), (10, 2)]
_PDIMS = [(400, 256), (256, 128), (128, 128), (128, 128), (128, 128)]
_IN_DIM = 400        # real input feature dim (streamed unpadded)
_OUT_PAD = 128       # lane-dense padded output width
_N_CLASSES = 2
_NEG_SLOPE = 0.01    # torch.nn.functional.leaky_relu default
_NEG_INF = -1e30     # baked into padded lanes of b5 -> exp underflows to 0


def _round_up(v, m):
    return ((v + m - 1) // m) * m


def _leaky_relu(x):
    return jnp.where(x >= 0, x, _NEG_SLOPE * x)


def mlp_kernel(x_ref,
               w1_ref, b1_ref, w2_ref, b2_ref, w3_ref, b3_ref,
               w4_ref, b4_ref, w5_ref, b5_ref,
               o_ref):
    # x tile: (TM, 400) f32 straight from HBM; cast to bf16 in-kernel.
    h = x_ref[...].astype(jnp.bfloat16)

    def layer(h_bf16, w_ref, b_ref):
        acc = jnp.dot(h_bf16, w_ref[...], preferred_element_type=jnp.float32)
        return _leaky_relu(acc + b_ref[...]).astype(jnp.bfloat16)

    h = layer(h, w1_ref, b1_ref)
    h = layer(h, w2_ref, b2_ref)
    h = layer(h, w3_ref, b3_ref)
    h = layer(h, w4_ref, b4_ref)

    # Padded lanes of h are exactly 0 (zero weight cols / rows), and b5's
    # padded lanes are -1e30, so padded logits vanish in exp() with no mask.
    logits = jnp.dot(h, w5_ref[...], preferred_element_type=jnp.float32) + b5_ref[...]
    m = jnp.max(logits, axis=-1, keepdims=True)
    e = jnp.exp(logits - m)
    denom = jnp.sum(e, axis=-1, keepdims=True)
    # Exact normalize so rows sum to 1 (approx reciprocal was only ~1e-3 accurate).
    o_ref[...] = (e / denom).astype(o_ref.dtype)


def mlp_forward(x, params, *, tile_m=1024):
    """x: (B, 400) float32. params: list of (W_pad bf16, b_pad f32 (1, out_pad))."""
    B = x.shape[0]

    # Batch tile: 1024 by default (big tiles amortize the ~0.35 us per-step
    # overhead), rounded to a multiple of 16 (bf16 sublane pack) for tiny
    # batches, and capped at ~half the batch so megacore (v7x) always sees
    # >=2 grid steps when the batch is large enough to split.
    tm = min(tile_m, _round_up(B, 16))
    tm = min(tm, max(256, _round_up(pl.cdiv(B, 2), 16)))
    b_pad = _round_up(B, tm)
    if b_pad != B:
        # Only batch-row padding (no feature pad, no dtype cast).
        x = jnp.pad(x, ((0, b_pad - B), (0, 0)))

    flat = []
    wb_specs = []
    for w, b in params:
        flat += [w, b]
        # Full-array blocks, same block every grid step -> weights stay
        # VMEM-resident instead of being re-DMA'd per batch tile.
        wb_specs.append(pl.BlockSpec(w.shape, lambda i: (0, 0)))
        wb_specs.append(pl.BlockSpec(b.shape, lambda i: (0, 0)))

    grid = (b_pad // tm,)
    x_spec = pl.BlockSpec((tm, _IN_DIM), lambda i: (i, 0))        # 400 == full dim
    out_spec = pl.BlockSpec((tm, _OUT_PAD), lambda i: (i, 0))     # lane-dense slab

    out = pl.pallas_call(
        mlp_kernel,
        out_shape=jax.ShapeDtypeStruct((b_pad, _OUT_PAD), jnp.bfloat16),
        grid=grid,
        in_specs=[x_spec] + wb_specs,
        out_specs=out_spec,
        compiler_params=pltpu.CompilerParams(
            # Batch axis is independent -> shard grid steps across v7x's 2 TCs.
            dimension_semantics=("parallel",)),
    )(x, *flat)
    return out[:B, :_N_CLASSES].astype(jnp.float32)


def init_params(key):
    """Torch-style init (U(-1/sqrt(in), 1/sqrt(in))), zero-padded to lane-aligned
    shapes. Weights pre-transposed (in, out), bf16; biases f32. b5's padded
    lanes hold -1e30 so the kernel needs no softmax mask."""
    params = []
    n_layers = len(_DIMS)
    for i, ((d_in, d_out), (p_in, p_out)) in enumerate(zip(_DIMS, _PDIMS)):
        kw, kb = jax.random.split(jax.random.fold_in(key, i))
        bound = 1.0 / (d_in ** 0.5)
        w = jax.random.uniform(kw, (d_in, d_out), jnp.float32, -bound, bound)
        b = jax.random.uniform(kb, (1, d_out), jnp.float32, -bound, bound)
        w_p = jnp.zeros((p_in, p_out), jnp.float32).at[:d_in, :d_out].set(w)
        if i == n_layers - 1:
            b_p = jnp.full((1, p_out), _NEG_INF, jnp.float32).at[:, :d_out].set(b)
        else:
            b_p = jnp.zeros((1, p_out), jnp.float32).at[:, :d_out].set(b)
        params.append((w_p.astype(jnp.bfloat16), b_p))
    # Sanity: weights must stay trivially VMEM-resident (v7x has 64 MiB/TC).
    wbytes = sum(w.size * w.dtype.itemsize + b.size * b.dtype.itemsize for w, b in params)
    assert wbytes < 4 * 1024 * 1024, "weights must stay trivially VMEM-resident"
    return params


def reference_forward(x, params):
    """Pure-JAX reference mirroring the kernel math (bf16 matmuls, f32 accum)."""
    h = x.astype(jnp.bfloat16)
    for w, b in params[:-1]:
        a = jnp.dot(h, w, preferred_element_type=jnp.float32) + b
        a = jnp.where(a >= 0, a, _NEG_SLOPE * a)
        h = a.astype(jnp.bfloat16)
    w, b = params[-1]
    logits = (jnp.dot(h, w, preferred_element_type=jnp.float32) + b)[:, :_N_CLASSES]
    return jax.nn.softmax(logits, axis=1)


if __name__ == "__main__":
    key = jax.random.PRNGKey(0)
    k_x, k_p = jax.random.split(key)
    params = init_params(k_p)

    # Small batch (single tile, tm=16 path).
    B = 8
    x = jax.random.normal(k_x, (B, 400), jnp.float32)
    out = jax.block_until_ready(mlp_forward(x, params))
    ref = reference_forward(x, params)
    assert out.shape == (B, _N_CLASSES)
    # Output slab is bf16 (write-traffic reduction) -> widen tolerance accordingly.
    assert jnp.allclose(out, ref, atol=5e-3, rtol=5e-3), "mismatch vs JAX reference (B=8)"
    assert jnp.allclose(jnp.sum(out, axis=1), 1.0, atol=5e-3), "softmax rows must sum to 1"

    # Larger batch exercising the multi-step grid + batch padding path
    # (tm capped at 256 -> 2 grid steps, pads 260 -> 512 rows).
    B2 = 260
    x2 = jax.random.normal(jax.random.fold_in(k_x, 1), (B2, 400), jnp.float32)
    out2 = jax.block_until_ready(mlp_forward(x2, params))
    ref2 = reference_forward(x2, params)
    assert out2.shape == (B2, _N_CLASSES)
    assert jnp.allclose(out2, ref2, atol=5e-3, rtol=5e-3), "mismatch vs JAX reference (B=260)"
    assert jnp.allclose(jnp.sum(out2, axis=1), 1.0, atol=5e-3), "softmax rows must sum to 1"

    print("KERNEL_OK")
</pallas_src>

<mosaic_0001>
module attributes {stable_mosaic.version = 11 : i64} {
  func.func @mlp_kernel(%arg0: i32, %arg1: memref<16x400xf32, #tpu.memory_space<vmem>>, %arg2: memref<400x256xbf16, #tpu.memory_space<vmem>>, %arg3: memref<1x256xf32, #tpu.memory_space<vmem>>, %arg4: memref<256x128xbf16, #tpu.memory_space<vmem>>, %arg5: memref<1x128xf32, #tpu.memory_space<vmem>>, %arg6: memref<128x128xbf16, #tpu.memory_space<vmem>>, %arg7: memref<1x128xf32, #tpu.memory_space<vmem>>, %arg8: memref<128x128xbf16, #tpu.memory_space<vmem>>, %arg9: memref<1x128xf32, #tpu.memory_space<vmem>>, %arg10: memref<128x128xbf16, #tpu.memory_space<vmem>>, %arg11: memref<1x128xf32, #tpu.memory_space<vmem>>, %arg12: memref<16x128xbf16, #tpu.memory_space<vmem>>) attributes {dimension_semantics = [#tpu.dimension_semantics<parallel>], iteration_bounds = array<i64: 1>, scalar_prefetch = 0 : i64, scratch_operands = 0 : i64, tpu.core_type = #tpu.core_type<tc>, window_params = [{transform_indices = @transform_0, window_bounds = array<i64: 16, 400>}, {pipeline_mode = #tpu.pipeline_mode<synchronous>, transform_indices = @transform_1, window_bounds = array<i64: 400, 256>}, {pipeline_mode = #tpu.pipeline_mode<synchronous>, transform_indices = @transform_2, window_bounds = array<i64: 1, 256>}, {pipeline_mode = #tpu.pipeline_mode<synchronous>, transform_indices = @transform_3, window_bounds = array<i64: 256, 128>}, {pipeline_mode = #tpu.pipeline_mode<synchronous>, transform_indices = @transform_4, window_bounds = array<i64: 1, 128>}, {pipeline_mode = #tpu.pipeline_mode<synchronous>, transform_indices = @transform_5, window_bounds = array<i64: 128, 128>}, {pipeline_mode = #tpu.pipeline_mode<synchronous>, transform_indices = @transform_6, window_bounds = array<i64: 1, 128>}, {pipeline_mode = #tpu.pipeline_mode<synchronous>, transform_indices = @transform_7, window_bounds = array<i64: 128, 128>}, {pipeline_mode = #tpu.pipeline_mode<synchronous>, transform_indices = @transform_8, window_bounds = array<i64: 1, 128>}, {pipeline_mode = #tpu.pipeline_mode<synchronous>, transform_indices = @transform_9, window_bounds = array<i64: 128, 128>}, {pipeline_mode = #tpu.pipeline_mode<synchronous>, transform_indices = @transform_10, window_bounds = array<i64: 1, 128>}, {transform_indices = @transform_11, window_bounds = array<i64: 16, 128>}]} {
    %c0 = arith.constant 0 : index
    %c0_0 = arith.constant 0 : index
    %0 = vector.load %arg1[%c0, %c0_0] : memref<16x400xf32, #tpu.memory_space<vmem>>, vector<16x400xf32>
    %1 = arith.truncf %0 : vector<16x400xf32> to vector<16x400xbf16>
    %c0_1 = arith.constant 0 : index
    %c0_2 = arith.constant 0 : index
    %2 = vector.load %arg2[%c0_1, %c0_2] : memref<400x256xbf16, #tpu.memory_space<vmem>>, vector<400x256xbf16>
    %cst = arith.constant dense<0.000000e+00> : vector<16x256xf32>
    %3 = tpu.matmul %1, %2, %cst {dimension_numbers = #tpu.dot_dimension_numbers<[1], [0], [0], [1], [0, 0, 1, 1], [], []>} : vector<16x400xbf16>, vector<400x256xbf16>, vector<16x256xf32> -> vector<16x256xf32>
    %c0_3 = arith.constant 0 : index
    %c0_4 = arith.constant 0 : index
    %4 = vector.load %arg3[%c0_3, %c0_4] : memref<1x256xf32, #tpu.memory_space<vmem>>, vector<1x256xf32>
    %5 = vector.broadcast %4 : vector<1x256xf32> to vector<16x256xf32>
    %6 = arith.addf %3, %5 : vector<16x256xf32>
    %cst_5 = arith.constant 0.000000e+00 : f32
    %7 = vector.broadcast %cst_5 : f32 to vector<16x256xf32>
    %8 = arith.cmpf oge, %6, %7 : vector<16x256xf32>
    %cst_6 = arith.constant 0.00999999977 : f32
    %9 = vector.broadcast %cst_6 : f32 to vector<16x256xf32>
    %10 = arith.mulf %9, %6 : vector<16x256xf32>
    %11 = arith.select %8, %6, %10 : vector<16x256xi1>, vector<16x256xf32>
    %12 = arith.truncf %11 : vector<16x256xf32> to vector<16x256xbf16>
    %c0_7 = arith.constant 0 : index
    %c0_8 = arith.constant 0 : index
    %13 = vector.load %arg4[%c0_7, %c0_8] : memref<256x128xbf16, #tpu.memory_space<vmem>>, vector<256x128xbf16>
    %cst_9 = arith.constant dense<0.000000e+00> : vector<16x128xf32>
    %14 = tpu.matmul %12, %13, %cst_9 {dimension_numbers = #tpu.dot_dimension_numbers<[1], [0], [0], [1], [0, 0, 1, 1], [], []>} : vector<16x256xbf16>, vector<256x128xbf16>, vector<16x128xf32> -> vector<16x128xf32>
    %c0_10 = arith.constant 0 : index
    %c0_11 = arith.constant 0 : index
    %15 = vector.load %arg5[%c0_10, %c0_11] : memref<1x128xf32, #tpu.memory_space<vmem>>, vector<1x128xf32>
    %16 = vector.broadcast %15 : vector<1x128xf32> to vector<16x128xf32>
    %17 = arith.addf %14, %16 : vector<16x128xf32>
    %cst_12 = arith.constant 0.000000e+00 : f32
    %18 = vector.broadcast %cst_12 : f32 to vector<16x128xf32>
    %19 = arith.cmpf oge, %17, %18 : vector<16x128xf32>
    %cst_13 = arith.constant 0.00999999977 : f32
    %20 = vector.broadcast %cst_13 : f32 to vector<16x128xf32>
    %21 = arith.mulf %20, %17 : vector<16x128xf32>
    %22 = arith.select %19, %17, %21 : vector<16x128xi1>, vector<16x128xf32>
    %23 = arith.truncf %22 : vector<16x128xf32> to vector<16x128xbf16>
    %c0_14 = arith.constant 0 : index
    %c0_15 = arith.constant 0 : index
    %24 = vector.load %arg6[%c0_14, %c0_15] : memref<128x128xbf16, #tpu.memory_space<vmem>>, vector<128x128xbf16>
    %cst_16 = arith.constant dense<0.000000e+00> : vector<16x128xf32>
    %25 = tpu.matmul %23, %24, %cst_16 {dimension_numbers = #tpu.dot_dimension_numbers<[1], [0], [0], [1], [0, 0, 1, 1], [], []>} : vector<16x128xbf16>, vector<128x128xbf16>, vector<16x128xf32> -> vector<16x128xf32>
    %c0_17 = arith.constant 0 : index
    %c0_18 = arith.constant 0 : index
    %26 = vector.load %arg7[%c0_17, %c0_18] : memref<1x128xf32, #tpu.memory_space<vmem>>, vector<1x128xf32>
    %27 = vector.broadcast %26 : vector<1x128xf32> to vector<16x128xf32>
    %28 = arith.addf %25, %27 : vector<16x128xf32>
    %cst_19 = arith.constant 0.000000e+00 : f32
    %29 = vector.broadcast %cst_19 : f32 to vector<16x128xf32>
    %30 = arith.cmpf oge, %28, %29 : vector<16x128xf32>
    %cst_20 = arith.constant 0.00999999977 : f32
    %31 = vector.broadcast %cst_20 : f32 to vector<16x128xf32>
    %32 = arith.mulf %31, %28 : vector<16x128xf32>
    %33 = arith.select %30, %28, %32 : vector<16x128xi1>, vector<16x128xf32>
    %34 = arith.truncf %33 : vector<16x128xf32> to vector<16x128xbf16>
    %c0_21 = arith.constant 0 : index
    %c0_22 = arith.constant 0 : index
    %35 = vector.load %arg8[%c0_21, %c0_22] : memref<128x128xbf16, #tpu.memory_space<vmem>>, vector<128x128xbf16>
    %cst_23 = arith.constant dense<0.000000e+00> : vector<16x128xf32>
    %36 = tpu.matmul %34, %35, %cst_23 {dimension_numbers = #tpu.dot_dimension_numbers<[1], [0], [0], [1], [0, 0, 1, 1], [], []>} : vector<16x128xbf16>, vector<128x128xbf16>, vector<16x128xf32> -> vector<16x128xf32>
    %c0_24 = arith.constant 0 : index
    %c0_25 = arith.constant 0 : index
    %37 = vector.load %arg9[%c0_24, %c0_25] : memref<1x128xf32, #tpu.memory_space<vmem>>, vector<1x128xf32>
    %38 = vector.broadcast %37 : vector<1x128xf32> to vector<16x128xf32>
    %39 = arith.addf %36, %38 : vector<16x128xf32>
    %cst_26 = arith.constant 0.000000e+00 : f32
    %40 = vector.broadcast %cst_26 : f32 to vector<16x128xf32>
    %41 = arith.cmpf oge, %39, %40 : vector<16x128xf32>
    %cst_27 = arith.constant 0.00999999977 : f32
    %42 = vector.broadcast %cst_27 : f32 to vector<16x128xf32>
    %43 = arith.mulf %42, %39 : vector<16x128xf32>
    %44 = arith.select %41, %39, %43 : vector<16x128xi1>, vector<16x128xf32>
    %45 = arith.truncf %44 : vector<16x128xf32> to vector<16x128xbf16>
    %c0_28 = arith.constant 0 : index
    %c0_29 = arith.constant 0 : index
    %46 = vector.load %arg10[%c0_28, %c0_29] : memref<128x128xbf16, #tpu.memory_space<vmem>>, vector<128x128xbf16>
    %cst_30 = arith.constant dense<0.000000e+00> : vector<16x128xf32>
    %47 = tpu.matmul %45, %46, %cst_30 {dimension_numbers = #tpu.dot_dimension_numbers<[1], [0], [0], [1], [0, 0, 1, 1], [], []>} : vector<16x128xbf16>, vector<128x128xbf16>, vector<16x128xf32> -> vector<16x128xf32>
    %c0_31 = arith.constant 0 : index
    %c0_32 = arith.constant 0 : index
    %48 = vector.load %arg11[%c0_31, %c0_32] : memref<1x128xf32, #tpu.memory_space<vmem>>, vector<1x128xf32>
    %49 = vector.broadcast %48 : vector<1x128xf32> to vector<16x128xf32>
    %50 = arith.addf %47, %49 : vector<16x128xf32>
    %cst_33 = arith.constant dense<0xFF800000> : vector<16xf32>
    %51 = vector.multi_reduction <maximumf>, %50, %cst_33 [1] : vector<16x128xf32> to vector<16xf32>
    %52 = vector.shape_cast %51 : vector<16xf32> to vector<16x1xf32>
    %53 = vector.broadcast %52 : vector<16x1xf32> to vector<16x128xf32>
    %54 = arith.subf %50, %53 : vector<16x128xf32>
    %55 = math.exp %54 : vector<16x128xf32>
    %cst_34 = arith.constant dense<0.000000e+00> : vector<16xf32>
    %56 = vector.multi_reduction <add>, %55, %cst_34 [1] : vector<16x128xf32> to vector<16xf32>
    %57 = vector.shape_cast %56 : vector<16xf32> to vector<16x1xf32>
    %58 = vector.broadcast %57 : vector<16x1xf32> to vector<16x128xf32>
    %59 = arith.divf %55, %58 : vector<16x128xf32>
    %60 = arith.truncf %59 : vector<16x128xf32> to vector<16x128xbf16>
    %c0_35 = arith.constant 0 : index
    %c0_36 = arith.constant 0 : index
    %61 = vector.load %arg12[%c0_35, %c0_36] : memref<16x128xbf16, #tpu.memory_space<vmem>>, vector<16x128xbf16>
    tpu.vector_store %arg12[%c0_35, %c0_36], %60 {strides = array<i32>} : memref<16x128xbf16, #tpu.memory_space<vmem>>, vector<16x128xbf16>,
    return
  }
  func.func @transform_0(%arg0: i32) -> (i32, i32) {
    %c0_i32 = arith.constant 0 : i32
    %c0_i32_0 = arith.constant 0 : i32
    return %arg0, %c0_i32 : i32, i32
  }
  func.func @transform_1(%arg0: i32) -> (i32, i32) {
    %c0_i32 = arith.constant 0 : i32
    %c0_i32_0 = arith.constant 0 : i32
    %c0_i32_1 = arith.constant 0 : i32
    return %c0_i32, %c0_i32_0 : i32, i32
  }
  func.func @transform_2(%arg0: i32) -> (i32, i32) {
    %c0_i32 = arith.constant 0 : i32
    %c0_i32_0 = arith.constant 0 : i32
    %c0_i32_1 = arith.constant 0 : i32
    return %c0_i32, %c0_i32_0 : i32, i32
  }
  func.func @transform_3(%arg0: i32) -> (i32, i32) {
    %c0_i32 = arith.constant 0 : i32
    %c0_i32_0 = arith.constant 0 : i32
    %c0_i32_1 = arith.constant 0 : i32
    return %c0_i32, %c0_i32_0 : i32, i32
  }
  func.func @transform_4(%arg0: i32) -> (i32, i32) {
    %c0_i32 = arith.constant 0 : i32
    %c0_i32_0 = arith.constant 0 : i32
    %c0_i32_1 = arith.constant 0 : i32
    return %c0_i32, %c0_i32_0 : i32, i32
  }
  func.func @transform_5(%arg0: i32) -> (i32, i32) {
    %c0_i32 = arith.constant 0 : i32
    %c0_i32_0 = arith.constant 0 : i32
    %c0_i32_1 = arith.constant 0 : i32
    return %c0_i32, %c0_i32_0 : i32, i32
  }
  func.func @transform_6(%arg0: i32) -> (i32, i32) {
    %c0_i32 = arith.constant 0 : i32
    %c0_i32_0 = arith.constant 0 : i32
    %c0_i32_1 = arith.constant 0 : i32
    return %c0_i32, %c0_i32_0 : i32, i32
  }
  func.func @transform_7(%arg0: i32) -> (i32, i32) {
    %c0_i32 = arith.constant 0 : i32
    %c0_i32_0 = arith.constant 0 : i32
    %c0_i32_1 = arith.constant 0 : i32
    return %c0_i32, %c0_i32_0 : i32, i32
  }
  func.func @transform_8(%arg0: i32) -> (i32, i32) {
    %c0_i32 = arith.constant 0 : i32
    %c0_i32_0 = arith.constant 0 : i32
    %c0_i32_1 = arith.constant 0 : i32
    return %c0_i32, %c0_i32_0 : i32, i32
  }
  func.func @transform_9(%arg0: i32) -> (i32, i32) {
    %c0_i32 = arith.constant 0 : i32
    %c0_i32_0 = arith.constant 0 : i32
    %c0_i32_1 = arith.constant 0 : i32
    return %c0_i32, %c0_i32_0 : i32, i32
  }
  func.func @transform_10(%arg0: i32) -> (i32, i32) {
    %c0_i32 = arith.constant 0 : i32
    %c0_i32_0 = arith.constant 0 : i32
    %c0_i32_1 = arith.constant 0 : i32
    return %c0_i32, %c0_i32_0 : i32, i32
  }
  func.func @transform_11(%arg0: i32) -> (i32, i32) {
    %c0_i32 = arith.constant 0 : i32
    %c0_i32_0 = arith.constant 0 : i32
    return %arg0, %c0_i32 : i32, i32
  }
}

</mosaic_0001>

<llo_original>
// kernel: tpu_custom_call.1
$region0: #{tpu_custom_call.1}
  #allocation0 [shape = 'u32[]', space=smem, size = 0x4, offset = 0x4, fixed_abs, tag = 'smem constant byte address 0x4 - core index']
  #allocation1 [shape = 'u32[144,128]{1,0:T(1,128)}', space=vmem, size = 0x12000, scoped, tag = 'internal scratch']
  %s0 = inlined_call_operand.hbm [shape: f32[16,400], index: 0, kind: input, shape index: {}]
  %s1 = inlined_call_operand.hbm [shape: bf16[400,256], index: 1, kind: input, shape index: {}]
  %s2 = inlined_call_operand.vmem [shape: f32[1,256], index: 2, kind: input, shape index: {}]
  %s3 = inlined_call_operand.hbm [shape: bf16[256,128], index: 3, kind: input, shape index: {}]
  %s4 = inlined_call_operand.vmem [shape: f32[1,128], index: 4, kind: input, shape index: {}]
  %s5 = inlined_call_operand.hbm [shape: bf16[128,128], index: 5, kind: input, shape index: {}]
  %s6 = inlined_call_operand.vmem [shape: f32[1,128], index: 6, kind: input, shape index: {}]
  %s7 = inlined_call_operand.hbm [shape: bf16[128,128], index: 7, kind: input, shape index: {}]
  %s8 = inlined_call_operand.vmem [shape: f32[1,128], index: 8, kind: input, shape index: {}]
  %s9 = inlined_call_operand.hbm [shape: bf16[128,128], index: 9, kind: input, shape index: {}]
  %s10 = inlined_call_operand.vmem [shape: f32[1,128], index: 10, kind: input, shape index: {}]
  %s11 = inlined_call_operand.hbm [shape: bf16[16,128], index: 11, kind: output, shape index: {}]
  %s12 = sld [smem:[#allocation0]]
  $region78: #{tpu_custom_call.1} parent=0
    _
  %s14 = ssub.s32 1, %s12
  %s15 = scalar_select 0, %s14, %s12
  $region1: #{tpu_custom_call.1} parent=0
    #allocation2 [shape = 'u8[32768]{0}', space=vmem, size = 0x8000, scoped, tag = 'input window, operand 0, single buffered']
    #allocation3 [shape = 's32[1]{0}', space=sflag, size = 0x4, scoped, tag = 'scoped memory for tpu_custom_call.1']
    #allocation4 [shape = 's32[1]{0}', space=sflag, size = 0x4, scoped, tag = 'scoped memory for tpu_custom_call.1']
    #allocation5 [shape = 'u8[204800]{0}', space=vmem, size = 0x32000, scoped, tag = 'input window, operand 1, single buffered']
    #allocation6 [shape = 's32[1]{0}', space=sflag, size = 0x4, scoped, tag = 'scoped memory for tpu_custom_call.1']
    #allocation7 [shape = 'u8[65536]{0}', space=vmem, size = 0x10000, scoped, tag = 'input window, operand 3, single buffered']
    #allocation8 [shape = 'u8[32768]{0}', space=vmem, size = 0x8000, scoped, tag = 'input window, operand 5, single buffered']
    #allocation9 [shape = 's32[1]{0}', space=sflag, size = 0x4, scoped, tag = 'scoped memory for tpu_custom_call.1']
    #allocation10 [shape = 'u8[32768]{0}', space=vmem, size = 0x8000, scoped, tag = 'input window, operand 7, single buffered']
    #allocation11 [shape = 'u8[32768]{0}', space=vmem, size = 0x8000, scoped, tag = 'input window, operand 9, single buffered']
    #allocation12 [shape = 's32[1]{0}', space=sflag, size = 0x4, scoped, tag = 'scoped memory for tpu_custom_call.1']
    #allocation13 [shape = 'u8[4096]{0}', space=vmem, size = 0x1000, scoped, tag = 'output window, operand 0, single buffered']
    %16 = vsyncpa [#allocation3], 0
    %17 = vsyncpa [#allocation6], 0
    %18 = vsyncpa [#allocation9], 0
    %19 = vsyncpa [#allocation12], 0
    %20 = vsyncpa [#allocation4], 0
    // Predicated region
    $region2: #{tpu_custom_call.1} parent=1 // pred_check
      _
    $region3: #{tpu_custom_call.1} parent=1 // pred_check_branch
      %22 = sbr.rel (0) target = $region5
    $region4: #{tpu_custom_call.1} parent=1 // pred_region
      %s24 = ssub.s32 1024, 1024
      %25 = vsyncadd [#allocation3], %s24
      %s26 = sshll.u32 [#allocation2], 4
      %s27 = int_to_ptr.vmem [resolvable:$true] %s26
      %32 = dma.hbm_to_vmem [thread:$0]  %s0, 1024, %s27, [#allocation3], 512, 512, 32
    $region5: #{tpu_custom_call.1} parent=1 // pred_fallthru
      _
    // Predicated region
    $region6: #{tpu_custom_call.1} parent=1 // pred_check
      _
    $region7: #{tpu_custom_call.1} parent=1 // pred_check_branch
      %34 = sbr.rel (0) target = $region9
    $region8: #{tpu_custom_call.1} parent=1 // pred_region
      %s36 = ssub.s32 6400, 6400
      %37 = vsyncadd [#allocation6], %s36
      %s38 = sshll.u32 [#allocation5], 4
      %s39 = int_to_ptr.vmem [resolvable:$true] %s38
      %44 = dma.hbm_to_vmem [thread:$0]  %s1, 6400, %s39, [#allocation6], 128, 128, 8
    $region9: #{tpu_custom_call.1} parent=1 // pred_fallthru
      _
    // Predicated region
    $region10: #{tpu_custom_call.1} parent=1 // pred_check
      _
    $region11: #{tpu_custom_call.1} parent=1 // pred_check_branch
      %46 = sbr.rel (0) target = $region13
    $region12: #{tpu_custom_call.1} parent=1 // pred_region
      _
    $region13: #{tpu_custom_call.1} parent=1 // pred_fallthru
      _
    // Predicated region
    $region14: #{tpu_custom_call.1} parent=1 // pred_check
      _
    $region15: #{tpu_custom_call.1} parent=1 // pred_check_branch
      %48 = sbr.rel (0) target = $region17
    $region16: #{tpu_custom_call.1} parent=1 // pred_region
      %s50 = ssub.s32 2048, 2048
      %51 = vsyncadd [#allocation6], %s50
      %s52 = sshll.u32 [#allocation7], 4
      %s53 = int_to_ptr.vmem [resolvable:$true] %s52
      %58 = dma.hbm_to_vmem [thread:$0]  %s3, 2048, %s53, [#allocation6], 64, 64, 4
    $region17: #{tpu_custom_call.1} parent=1 // pred_fallthru
      _
    // Predicated region
    $region18: #{tpu_custom_call.1} parent=1 // pred_check
      _
    $region19: #{tpu_custom_call.1} parent=1 // pred_check_branch
      %60 = sbr.rel (0) target = $region21
    $region20: #{tpu_custom_call.1} parent=1 // pred_region
      _
    $region21: #{tpu_custom_call.1} parent=1 // pred_fallthru
      _
    // Predicated region
    $region22: #{tpu_custom_call.1} parent=1 // pred_check
      _
    $region23: #{tpu_custom_call.1} parent=1 // pred_check_branch
      %62 = sbr.rel (0) target = $region25
    $region24: #{tpu_custom_call.1} parent=1 // pred_region
      %s64 = ssub.s32 1024, 1024
      %65 = vsyncadd [#allocation9], %s64
      %s66 = sshll.u32 [#allocation8], 4
      %s67 = int_to_ptr.vmem [resolvable:$true] %s66
      %72 = dma.hbm_to_vmem [thread:$0]  %s5, 1024, %s67, [#allocation9], 64, 64, 4
    $region25: #{tpu_custom_call.1} parent=1 // pred_fallthru
      _
    // Predicated region
    $region26: #{tpu_custom_call.1} parent=1 // pred_check
      _
    $region27: #{tpu_custom_call.1} parent=1 // pred_check_branch
      %74 = sbr.rel (0) target = $region29
    $region28: #{tpu_custom_call.1} parent=1 // pred_region
      _
    $region29: #{tpu_custom_call.1} parent=1 // pred_fallthru
      _
    // Predicated region
    $region30: #{tpu_custom_call.1} parent=1 // pred_check
      _
    $region31: #{tpu_custom_call.1} parent=1 // pred_check_branch
      %76 = sbr.rel (0) target = $region33
    $region32: #{tpu_custom_call.1} parent=1 // pred_region
      %s78 = ssub.s32 1024, 1024
      %79 = vsyncadd [#allocation9], %s78
      %s80 = sshll.u32 [#allocation10], 4
      %s81 = int_to_ptr.vmem [resolvable:$true] %s80
      %86 = dma.hbm_to_vmem [thread:$0]  %s7, 1024, %s81, [#allocation9], 64, 64, 4
    $region33: #{tpu_custom_call.1} parent=1 // pred_fallthru
      _
    // Predicated region
    $region34: #{tpu_custom_call.1} parent=1 // pred_check
      _
    $region35: #{tpu_custom_call.1} parent=1 // pred_check_branch
      %88 = sbr.rel (0) target = $region37
    $region36: #{tpu_custom_call.1} parent=1 // pred_region
      _
    $region37: #{tpu_custom_call.1} parent=1 // pred_fallthru
      _
    // Predicated region
    $region38: #{tpu_custom_call.1} parent=1 // pred_check
      _
    $region39: #{tpu_custom_call.1} parent=1 // pred_check_branch
      %90 = sbr.rel (0) target = $region41
    $region40: #{tpu_custom_call.1} parent=1 // pred_region
      %s92 = ssub.s32 1024, 1024
      %93 = vsyncadd [#allocation12], %s92
      %s94 = sshll.u32 [#allocation11], 4
      %s95 = int_to_ptr.vmem [resolvable:$true] %s94
      %100 = dma.hbm_to_vmem [thread:$0]  %s9, 1024, %s95, [#allocation12], 64, 64, 4
    $region41: #{tpu_custom_call.1} parent=1 // pred_fallthru
      _
    // Predicated region
    $region42: #{tpu_custom_call.1} parent=1 // pred_check
      _
    $region43: #{tpu_custom_call.1} parent=1 // pred_check_branch
      %102 = sbr.rel (0) target = $region45
    $region44: #{tpu_custom_call.1} parent=1 // pred_region
      _
    $region45: #{tpu_custom_call.1} parent=1 // pred_fallthru
      _
    // Predicated region
    $region46: #{tpu_custom_call.1} parent=1 // pred_check
      _
    $region47: #{tpu_custom_call.1} parent=1 // pred_check_branch
      %104 = sbr.rel (0) target = $region49
    $region48: #{tpu_custom_call.1} parent=1 // pred_region
      %105 = dma.done [#allocation3], 1024
    $region49: #{tpu_custom_call.1} parent=1 // pred_fallthru
      _
    // Predicated region
    $region50: #{tpu_custom_call.1} parent=1 // pred_check
      _
    $region51: #{tpu_custom_call.1} parent=1 // pred_check_branch
      %107 = sbr.rel (0) target = $region53
    $region52: #{tpu_custom_call.1} parent=1 // pred_region
      %108 = dma.done [#allocation6], 6400
    $region53: #{tpu_custom_call.1} parent=1 // pred_fallthru
      _
    // Predicated region
    $region54: #{tpu_custom_call.1} parent=1 // pred_check
      _
    $region55: #{tpu_custom_call.1} parent=1 // pred_check_branch
      %110 = sbr.rel (0) target = $region57
    $region56: #{tpu_custom_call.1} parent=1 // pred_region
      %111 = dma.done [#allocation6], 2048
    $region57: #{tpu_custom_call.1} parent=1 // pred_fallthru
      _
    // Predicated region
    $region58: #{tpu_custom_call.1} parent=1 // pred_check
      _
    $region59: #{tpu_custom_call.1} parent=1 // pred_check_branch
      %113 = sbr.rel (0) target = $region61
    $region60: #{tpu_custom_call.1} parent=1 // pred_region
      %114 = dma.done [#allocation9], 1024
    $region61: #{tpu_custom_call.1} parent=1 // pred_fallthru
      _
    // Predicated region
    $region62: #{tpu_custom_call.1} parent=1 // pred_check
      _
    $region63: #{tpu_custom_call.1} parent=1 // pred_check_branch
      %116 = sbr.rel (0) target = $region65
    $region64: #{tpu_custom_call.1} parent=1 // pred_region
      %117 = dma.done [#allocation9], 1024
    $region65: #{tpu_custom_call.1} parent=1 // pred_fallthru
      _
    // Predicated region
    $region66: #{tpu_custom_call.1} parent=1 // pred_check
      _
    $region67: #{tpu_custom_call.1} parent=1 // pred_check_branch
      %119 = sbr.rel (0) target = $region69
    $region68: #{tpu_custom_call.1} parent=1 // pred_region
      %120 = dma.done [#allocation12], 1024
    $region69: #{tpu_custom_call.1} parent=1 // pred_fallthru
      _
    %v122 = vld [vmem:[#allocation2] sm:$0xff]
    %v123 = vld [vmem:[#allocation2 + $0x8] sm:$0xff]
    %v124 = vld [vmem:[#allocation2 + $0x10] sm:$0xff]
    %v125 = vld [vmem:[#allocation2 + $0x18] sm:$0xff]
    %v126 = vld [vmem:[#allocation2 + $0x20] sm:$0xff]
    %v127 = vld [vmem:[#allocation2 + $0x28] sm:$0xff]
    %v128 = vld [vmem:[#allocation2 + $0x30] sm:$0xff]
    %v129 = vld [vmem:[#allocation2 + $0x38] sm:$0xff]
    %v130 = vpack.c.bf16 %v126, %v122
    %v131 = vpack.c.bf16 %v127, %v123
    %v132 = vpack.c.bf16 %v128, %v124
    %v133 = vpack.c.bf16 %v129, %v125
    %v134 = vld [vmem:[#allocation5] sm:$0xff]
    %v135 = vld [vmem:[#allocation5 + $0x8] sm:$0xff]
    %v136 = vld [vmem:[#allocation5 + $0x10] sm:$0xff]
    %v137 = vld [vmem:[#allocation5 + $0x18] sm:$0xff]
    %v138 = vld [vmem:[#allocation5 + $0x20] sm:$0xff]
    %v139 = vld [vmem:[#allocation5 + $0x28] sm:$0xff]
    %v140 = vld [vmem:[#allocation5 + $0x30] sm:$0xff]
    %v141 = vld [vmem:[#allocation5 + $0x38] sm:$0xff]
    %v142 = vld [vmem:[#allocation5 + $0x40] sm:$0xff]
    %v143 = vld [vmem:[#allocation5 + $0x48] sm:$0xff]
    %v144 = vld [vmem:[#allocation5 + $0x50] sm:$0xff]
    %v145 = vld [vmem:[#allocation5 + $0x58] sm:$0xff]
    %v146 = vld [vmem:[#allocation5 + $0x60] sm:$0xff]
    %v147 = vld [vmem:[#allocation5 + $0x68] sm:$0xff]
    %v148 = vld [vmem:[#allocation5 + $0x70] sm:$0xff]
    %v149 = vld [vmem:[#allocation5 + $0x78] sm:$0xff]
    %v150 = vld [vmem:[#allocation5 + $0x80] sm:$0xff]
    %v151 = vld [vmem:[#allocation5 + $0x88] sm:$0xff]
    %v152 = vld [vmem:[#allocation5 + $0x90] sm:$0xff]
    %v153 = vld [vmem:[#allocation5 + $0x98] sm:$0xff]
    %v154 = vld [vmem:[#allocation5 + $0xa0] sm:$0xff]
    %v155 = vld [vmem:[#allocation5 + $0xa8] sm:$0xff]
    %v156 = vld [vmem:[#allocation5 + $0xb0] sm:$0xff]
    %v157 = vld [vmem:[#allocation5 + $0xb8] sm:$0xff]
    %v158 = vld [vmem:[#allocation5 + $0xc0] sm:$0xff]
    %v159 = vld [vmem:[#allocation5 + $0xc8] sm:$0xff]
    %v160 = vld [vmem:[#allocation5 + $0xd0] sm:$0xff]
    %v161 = vld [vmem:[#allocation5 + $0xd8] sm:$0xff]
    %v162 = vld [vmem:[#allocation5 + $0xe0] sm:$0xff]
    %v163 = vld [vmem:[#allocation5 + $0xe8] sm:$0xff]
    %v164 = vld [vmem:[#allocation5 + $0xf0] sm:$0xff]
    %v165 = vld [vmem:[#allocation5 + $0xf8] sm:$0xff]
    %v166 = vld [vmem:[#allocation5 + $0x100] sm:$0xff]
    %v167 = vld [vmem:[#allocation5 + $0x108] sm:$0xff]
    %v168 = vld [vmem:[#allocation5 + $0x110] sm:$0xff]
    %v169 = vld [vmem:[#allocation5 + $0x118] sm:$0xff]
    %v170 = vld [vmem:[#allocation5 + $0x120] sm:$0xff]
    %v171 = vld [vmem:[#allocation5 + $0x128] sm:$0xff]
    %v172 = vld [vmem:[#allocation5 + $0x130] sm:$0xff]
    %v173 = vld [vmem:[#allocation5 + $0x138] sm:$0xff]
    %v174 = vld [vmem:[#allocation5 + $0x140] sm:$0xff]
    %v175 = vld [vmem:[#allocation5 + $0x148] sm:$0xff]
    %v176 = vld [vmem:[#allocation5 + $0x150] sm:$0xff]
    %v177 = vld [vmem:[#allocation5 + $0x158] sm:$0xff]
    %v178 = vld [vmem:[#allocation5 + $0x160] sm:$0xff]
    %v179 = vld [vmem:[#allocation5 + $0x168] sm:$0xff]
    %v180 = vld [vmem:[#allocation5 + $0x170] sm:$0xff]
    %v181 = vld [vmem:[#allocation5 + $0x178] sm:$0xff]
    %v182 = vld [vmem:[#allocation5 + $0x180] sm:$0xff]
    %v183 = vld [vmem:[#allocation5 + $0x188] sm:$0xff]
    %v184 = vld [vmem:[%s2] sm:$0x3]
    %v186 = vlaneseq
    %v187 = vshrl.u32 %v186, 7
    %v188 = vsub.s32 0, %v187
    %v189 = vrot.slane %v184, %v188
    %v190 = vlaneseq
    %v191 = vshrl.u32 %v190, 7
    %v192 = vsub.s32 1, %v191
    %v193 = vrot.slane %v184, %v192
    %v246 = vunpack.c.l.b16 %v134
    %v247 = vunpack.c.h.b16 %v134
    %v248 = vunpack.c.l.b16 %v135
    %v249 = vunpack.c.h.b16 %v135
    %v250 = vunpack.c.l.b16 %v136
    %v251 = vunpack.c.h.b16 %v136
    %v252 = vunpack.c.l.b16 %v137
    %v253 = vunpack.c.h.b16 %v137
    %v254 = vunpack.c.l.b16 %v138
    %v255 = vunpack.c.h.b16 %v138
    %v256 = vunpack.c.l.b16 %v139
    %v257 = vunpack.c.h.b16 %v139
    %v258 = vunpack.c.l.b16 %v140
    %v259 = vunpack.c.h.b16 %v140
    %v260 = vunpack.c.l.b16 %v141
    %v261 = vunpack.c.h.b16 %v141
    %v262 = vunpack.c.l.b16 %v142
    %v263 = vunpack.c.h.b16 %v142
    %v264 = vunpack.c.l.b16 %v143
    %v265 = vunpack.c.h.b16 %v143
    %v266 = vunpack.c.l.b16 %v144
    %v267 = vunpack.c.h.b16 %v144
    %v268 = vunpack.c.l.b16 %v145
    %v269 = vunpack.c.h.b16 %v145
    %v270 = vunpack.c.l.b16 %v146
    %v271 = vunpack.c.h.b16 %v146
    %v272 = vunpack.c.l.b16 %v147
    %v273 = vunpack.c.h.b16 %v147
    %v274 = vunpack.c.l.b16 %v148
    %v275 = vunpack.c.h.b16 %v148
    %v276 = vunpack.c.l.b16 %v149
    %v277 = vunpack.c.h.b16 %v149
    %v278 = vunpack.c.l.b16 %v150
    %v279 = vunpack.c.h.b16 %v150
    %v280 = vunpack.c.l.b16 %v151
    %v281 = vunpack.c.h.b16 %v151
    %v282 = vunpack.c.l.b16 %v152
    %v283 = vunpack.c.h.b16 %v152
    %v284 = vunpack.c.l.b16 %v153
    %v285 = vunpack.c.h.b16 %v153
    %v286 = vunpack.c.l.b16 %v154
    %v287 = vunpack.c.h.b16 %v154
    %v288 = vunpack.c.l.b16 %v155
    %v289 = vunpack.c.h.b16 %v155
    %v290 = vunpack.c.l.b16 %v156
    %v291 = vunpack.c.h.b16 %v156
    %v292 = vunpack.c.l.b16 %v157
    %v293 = vunpack.c.h.b16 %v157
    %v294 = vunpack.c.l.b16 %v158
    %v295 = vunpack.c.h.b16 %v158
    %v296 = vunpack.c.l.b16 %v159
    %v297 = vunpack.c.h.b16 %v159
    %v298 = vunpack.c.l.b16 %v160
    %v299 = vunpack.c.h.b16 %v160
    %v300 = vunpack.c.l.b16 %v161
    %v301 = vunpack.c.h.b16 %v161
    %v302 = vunpack.c.l.b16 %v162
    %v303 = vunpack.c.h.b16 %v162
    %v304 = vunpack.c.l.b16 %v163
    %v305 = vunpack.c.h.b16 %v163
    %v306 = vunpack.c.l.b16 %v164
    %v307 = vunpack.c.h.b16 %v164
    %v308 = vunpack.c.l.b16 %v165
    %v309 = vunpack.c.h.b16 %v165
    %v310 = vunpack.c.l.b16 %v166
    %v311 = vunpack.c.h.b16 %v166
    %v312 = vunpack.c.l.b16 %v167
    %v313 = vunpack.c.h.b16 %v167
    %v314 = vunpack.c.l.b16 %v168
    %v315 = vunpack.c.h.b16 %v168
    %v316 = vunpack.c.l.b16 %v169
    %v317 = vunpack.c.h.b16 %v169
    %v318 = vunpack.c.l.b16 %v170
    %v319 = vunpack.c.h.b16 %v170
    %v320 = vunpack.c.l.b16 %v171
    %v321 = vunpack.c.h.b16 %v171
    %v322 = vunpack.c.l.b16 %v172
    %v323 = vunpack.c.h.b16 %v172
    %v324 = vunpack.c.l.b16 %v173
    %v325 = vunpack.c.h.b16 %v173
    %v326 = vunpack.c.l.b16 %v174
    %v327 = vunpack.c.h.b16 %v174
    %v328 = vunpack.c.l.b16 %v175
    %v329 = vunpack.c.h.b16 %v175
    %v330 = vunpack.c.l.b16 %v176
    %v331 = vunpack.c.h.b16 %v176
    %v332 = vunpack.c.l.b16 %v177
    %v333 = vunpack.c.h.b16 %v177
    %v334 = vunpack.c.l.b16 %v178
    %v335 = vunpack.c.h.b16 %v178
    %v336 = vunpack.c.l.b16 %v179
    %v337 = vunpack.c.h.b16 %v179
    %v338 = vunpack.c.l.b16 %v180
    %v339 = vunpack.c.h.b16 %v180
    %v340 = vunpack.c.l.b16 %v181
    %v341 = vunpack.c.h.b16 %v181
    %v342 = vunpack.c.l.b16 %v182
    %v343 = vunpack.c.h.b16 %v182
    %v344 = vunpack.c.l.b16 %v183
    %v345 = vunpack.c.h.b16 %v183
    %v346 = vpack.c.b16 %v248, %v246
    %v347 = vpack.c.b16 %v249, %v247
    %v348 = vpack.c.b16 %v252, %v250
    %v349 = vpack.c.b16 %v253, %v251
    %v350 = vpack.c.b16 %v256, %v254
    %v351 = vpack.c.b16 %v257, %v255
    %v352 = vpack.c.b16 %v260, %v258
    %v353 = vpack.c.b16 %v261, %v259
    %v354 = vpack.c.b16 %v264, %v262
    %v355 = vpack.c.b16 %v265, %v263
    %v356 = vpack.c.b16 %v268, %v266
    %v357 = vpack.c.b16 %v269, %v267
    %v358 = vpack.c.b16 %v272, %v270
    %v359 = vpack.c.b16 %v273, %v271
    %v360 = vpack.c.b16 %v276, %v274
    %v361 = vpack.c.b16 %v277, %v275
    %v362 = vpack.c.b16 %v280, %v278
    %v363 = vpack.c.b16 %v281, %v279
    %v364 = vpack.c.b16 %v284, %v282
    %v365 = vpack.c.b16 %v285, %v283
    %v366 = vpack.c.b16 %v288, %v286
    %v367 = vpack.c.b16 %v289, %v287
    %v368 = vpack.c.b16 %v292, %v290
    %v369 = vpack.c.b16 %v293, %v291
    %v370 = vpack.c.b16 %v296, %v294
    %v371 = vpack.c.b16 %v297, %v295
    %v372 = vpack.c.b16 %v300, %v298
    %v373 = vpack.c.b16 %v301, %v299
    %v374 = vpack.c.b16 %v304, %v302
    %v375 = vpack.c.b16 %v305, %v303
    %v376 = vpack.c.b16 %v308, %v306
    %v377 = vpack.c.b16 %v309, %v307
    %v378 = vpack.c.b16 %v312, %v310
    %v379 = vpack.c.b16 %v313, %v311
    %v380 = vpack.c.b16 %v316, %v314
    %v381 = vpack.c.b16 %v317, %v315
    %v382 = vpack.c.b16 %v320, %v318
    %v383 = vpack.c.b16 %v321, %v319
    %v384 = vpack.c.b16 %v324, %v322
    %v385 = vpack.c.b16 %v325, %v323
    %v386 = vpack.c.b16 %v328, %v326
    %v387 = vpack.c.b16 %v329, %v327
    %v388 = vpack.c.b16 %v332, %v330
    %v389 = vpack.c.b16 %v333, %v331
    %v390 = vpack.c.b16 %v336, %v334
    %v391 = vpack.c.b16 %v337, %v335
    %v392 = vpack.c.b16 %v340, %v338
    %v393 = vpack.c.b16 %v341, %v339
    %v394 = vpack.c.b16 %v344, %v342
    %v395 = vpack.c.b16 %v345, %v343
    %vm446 = vcmask 130048
    %v448 = vsel %vm446, %v133, 0
    %450 = vmatprep.subr.bf16.mxu0 %v361
    %451 = vmatpush1.bf16.msra.mxu0 %v360
    %452 = vmatprep.subr.bf16.mxu0 %v359
    %453 = vmatpush1.bf16.msra.mxu0 %v358
    %454 = vmatprep.subr.bf16.mxu0 %v357
    %455 = vmatpush1.bf16.msra.mxu0 %v356
    %456 = vmatprep.subr.bf16.mxu0 %v355
    %457 = vmatpush1.bf16.msra.mxu0 %v354
    %458 = vmatprep.subr.bf16.mxu0 %v353
    %459 = vmatpush1.bf16.msra.mxu0 %v352
    %460 = vmatprep.subr.bf16.mxu0 %v351
    %461 = vmatpush1.bf16.msra.mxu0 %v350
    %462 = vmatprep.subr.bf16.mxu0 %v349
    %463 = vmatpush1.bf16.msra.mxu0 %v348
    %464 = vmatprep.subr.bf16.mxu0 %v347
    %465 = vmatpush1.bf16.msra.mxu0 %v346
    %466 = vmatprep.subr.bf16.mxu0 %v377
    %467 = vmatpush2.bf16.msra.mxu0 %v376
    %468 = vmatprep.subr.bf16.mxu0 %v375
    %469 = vmatpush2.bf16.msra.mxu0 %v374
    %470 = vmatprep.subr.bf16.mxu0 %v373
    %471 = vmatpush2.bf16.msra.mxu0 %v372
    %472 = vmatprep.subr.bf16.mxu0 %v371
    %473 = vmatpush2.bf16.msra.mxu0 %v370
    %474 = vmatprep.subr.bf16.mxu0 %v369
    %475 = vmatpush2.bf16.msra.mxu0 %v368
    %476 = vmatprep.subr.bf16.mxu0 %v367
    %477 = vmatpush2.bf16.msra.mxu0 %v366
    %478 = vmatprep.subr.bf16.mxu0 %v365
    %479 = vmatpush2.bf16.msra.mxu0 %v364
    %480 = vmatprep.subr.bf16.mxu0 %v363
    %481 = vmatpush2.bf16.msra.mxu0 %v362
    %482 = vmatprep.mubr.bf16.mxu0 %v131
    %483 = vmatmul.mubr.bf16.gmra.mxu0 %v130
    %v484 = vpop.f32.mrf.mxu0
    %v485 = vadd.f32 %v189, %v484
    %v486 = vpop.f32.mrf.mxu0
    %v487 = vadd.f32 %v193, %v486
    %v488 = vpop.f32.mrf.mxu0
    %v489 = vadd.f32 %v189, %v488
    %v490 = vpop.f32.mrf.mxu0
    %v491 = vadd.f32 %v193, %v490
    %492 = vdwg.mxu0
    %493 = vmatprep.subr.bf16.mxu0 %v393
    %494 = vmatpush1.bf16.msra.mxu0 %v392
    %495 = vmatprep.subr.bf16.mxu0 %v391
    %496 = vmatpush1.bf16.msra.mxu0 %v390
    %497 = vmatprep.subr.bf16.mxu0 %v389
    %498 = vmatpush1.bf16.msra.mxu0 %v388
    %499 = vmatprep.subr.bf16.mxu0 %v387
    %500 = vmatpush1.bf16.msra.mxu0 %v386
    %501 = vmatprep.subr.bf16.mxu0 %v385
    %502 = vmatpush1.bf16.msra.mxu0 %v384
    %503 = vmatprep.subr.bf16.mxu0 %v383
    %504 = vmatpush1.bf16.msra.mxu0 %v382
    %505 = vmatprep.subr.bf16.mxu0 %v381
    %506 = vmatpush1.bf16.msra.mxu0 %v380
    %507 = vmatprep.subr.bf16.mxu0 %v379
    %508 = vmatpush1.bf16.msra.mxu0 %v378
    %509 = vmatprep.subr.bf16.mxu0 0
    %510 = vmatpush2.bf16.msra.mxu0 0
    %511 = vmatprep.subr.bf16.mxu0 0
    %512 = vmatpush2.bf16.msra.mxu0 0
    %513 = vmatprep.subr.bf16.mxu0 0
    %514 = vmatpush2.bf16.msra.mxu0 0
    %515 = vmatprep.subr.bf16.mxu0 0
    %516 = vmatpush2.bf16.msra.mxu0 0
    %517 = vmatprep.subr.bf16.mxu0 0
    %518 = vmatpush2.bf16.msra.mxu0 0
    %519 = vmatprep.subr.bf16.mxu0 0
    %520 = vmatpush2.bf16.msra.mxu0 0
    %521 = vmatprep.subr.bf16.mxu0 0
    %522 = vmatpush2.bf16.msra.mxu0 0
    %523 = vmatprep.subr.bf16.mxu0 %v395
    %524 = vmatpush2.bf16.msra.mxu0 %v394
    %525 = vmatprep.mubr.bf16.mxu0 %v448
    %526 = vmatmul.mubr.bf16.gmra.mxu0 %v132
    %v527 = vpop.f32.mrf.mxu0
    %v528 = vadd.f32 %v485, %v527
    %v529 = vpop.f32.mrf.mxu0
    %v530 = vadd.f32 %v487, %v529
    %v531 = vpop.f32.mrf.mxu0
    %v532 = vadd.f32 %v489, %v531
    %v533 = vpop.f32.mrf.mxu0
    %v534 = vadd.f32 %v491, %v533
    %535 = vdwg.mxu0
    %vm536 = vcmp.ge.f32.partialorder %v528, 0.0
    %vm537 = vcmp.ge.f32.partialorder %v530, 0.0
    %vm538 = vcmp.ge.f32.partialorder %v532, 0.0
    %vm539 = vcmp.ge.f32.partialorder %v534, 0.0
    %v540 = vmul.f32 %v528, 0.01
    %v541 = vmul.f32 %v530, 0.01
    %v542 = vmul.f32 %v532, 0.01
    %v543 = vmul.f32 %v534, 0.01
    %v544 = vsel %vm536, %v528, %v540
    %v545 = vsel %vm537, %v530, %v541
    %v546 = vsel %vm538, %v532, %v542
    %v547 = vsel %vm539, %v534, %v543
    %v548 = vpack.c.bf16 %v546, %v544
    %v549 = vpack.c.bf16 %v547, %v545
    %v550 = vld [vmem:[#allocation7] sm:$0xf]
    %v551 = vld [vmem:[#allocation7 + $0x4] sm:$0xf]
    %v552 = vld [vmem:[#allocation7 + $0x8] sm:$0xf]
    %v553 = vld [vmem:[#allocation7 + $0xc] sm:$0xf]
    %v554 = vld [vmem:[#allocation7 + $0x10] sm:$0xf]
    %v555 = vld [vmem:[#allocation7 + $0x14] sm:$0xf]
    %v556 = vld [vmem:[#allocation7 + $0x18] sm:$0xf]
    %v557 = vld [vmem:[#allocation7 + $0x1c] sm:$0xf]
    %v558 = vld [vmem:[#allocation7 + $0x20] sm:$0xf]
    %v559 = vld [vmem:[#allocation7 + $0x24] sm:$0xf]
    %v560 = vld [vmem:[#allocation7 + $0x28] sm:$0xf]
    %v561 = vld [vmem:[#allocation7 + $0x2c] sm:$0xf]
    %v562 = vld [vmem:[#allocation7 + $0x30] sm:$0xf]
    %v563 = vld [vmem:[#allocation7 + $0x34] sm:$0xf]
    %v564 = vld [vmem:[#allocation7 + $0x38] sm:$0xf]
    %v565 = vld [vmem:[#allocation7 + $0x3c] sm:$0xf]
    %v566 = vld [vmem:[#allocation7 + $0x40] sm:$0xf]
    %v567 = vld [vmem:[#allocation7 + $0x44] sm:$0xf]
    %v568 = vld [vmem:[#allocation7 + $0x48] sm:$0xf]
    %v569 = vld [vmem:[#allocation7 + $0x4c] sm:$0xf]
    %v570 = vld [vmem:[#allocation7 + $0x50] sm:$0xf]
    %v571 = vld [vmem:[#allocation7 + $0x54] sm:$0xf]
    %v572 = vld [vmem:[#allocation7 + $0x58] sm:$0xf]
    %v573 = vld [vmem:[#allocation7 + $0x5c] sm:$0xf]
    %v574 = vld [vmem:[#allocation7 + $0x60] sm:$0xf]
    %v575 = vld [vmem:[#allocation7 + $0x64] sm:$0xf]
    %v576 = vld [vmem:[#allocation7 + $0x68] sm:$0xf]
    %v577 = vld [vmem:[#allocation7 + $0x6c] sm:$0xf]
    %v578 = vld [vmem:[#allocation7 + $0x70] sm:$0xf]
    %v579 = vld [vmem:[#allocation7 + $0x74] sm:$0xf]
    %v580 = vld [vmem:[#allocation7 + $0x78] sm:$0xf]
    %v581 = vld [vmem:[#allocation7 + $0x7c] sm:$0xf]
    %v582 = vld [vmem:[%s4] sm:$0x1]
    %v584 = vlaneseq
    %v585 = vshrl.u32 %v584, 7
    %v586 = vsub.s32 0, %v585
    %v587 = vrot.slane %v582, %v586
    %v621 = vunpack.c.l.b16 %v550
    %v622 = vunpack.c.l.b16 %v551
    %v623 = vunpack.c.l.b16 %v552
    %v624 = vunpack.c.l.b16 %v553
    %v625 = vunpack.c.l.b16 %v554
    %v626 = vunpack.c.l.b16 %v555
    %v627 = vunpack.c.l.b16 %v556
    %v628 = vunpack.c.l.b16 %v557
    %v629 = vunpack.c.l.b16 %v558
    %v630 = vunpack.c.l.b16 %v559
    %v631 = vunpack.c.l.b16 %v560
    %v632 = vunpack.c.l.b16 %v561
    %v633 = vunpack.c.l.b16 %v562
    %v634 = vunpack.c.l.b16 %v563
    %v635 = vunpack.c.l.b16 %v564
    %v636 = vunpack.c.l.b16 %v565
    %v637 = vunpack.c.l.b16 %v566
    %v638 = vunpack.c.l.b16 %v567
    %v639 = vunpack.c.l.b16 %v568
    %v640 = vunpack.c.l.b16 %v569
    %v641 = vunpack.c.l.b16 %v570
    %v642 = vunpack.c.l.b16 %v571
    %v643 = vunpack.c.l.b16 %v572
    %v644 = vunpack.c.l.b16 %v573
    %v645 = vunpack.c.l.b16 %v574
    %v646 = vunpack.c.l.b16 %v575
    %v647 = vunpack.c.l.b16 %v576
    %v648 = vunpack.c.l.b16 %v577
    %v649 = vunpack.c.l.b16 %v578
    %v650 = vunpack.c.l.b16 %v579
    %v651 = vunpack.c.l.b16 %v580
    %v652 = vunpack.c.l.b16 %v581
    %v653 = vpack.c.b16 %v622, %v621
    %v654 = vpack.c.b16 %v624, %v623
    %v655 = vpack.c.b16 %v626, %v625
    %v656 = vpack.c.b16 %v628, %v627
    %v657 = vpack.c.b16 %v630, %v629
    %v658 = vpack.c.b16 %v632, %v631
    %v659 = vpack.c.b16 %v634, %v633
    %v660 = vpack.c.b16 %v636, %v635
    %v661 = vpack.c.b16 %v638, %v637
    %v662 = vpack.c.b16 %v640, %v639
    %v663 = vpack.c.b16 %v642, %v641
    %v664 = vpack.c.b16 %v644, %v643
    %v665 = vpack.c.b16 %v646, %v645
    %v666 = vpack.c.b16 %v648, %v647
    %v667 = vpack.c.b16 %v650, %v649
    %v668 = vpack.c.b16 %v652, %v651
    %685 = vmatprep.subr.bf16.mxu0 0
    %686 = vmatpush1.bf16.msra.mxu0 %v660
    %687 = vmatprep.subr.bf16.mxu0 0
    %688 = vmatpush1.bf16.msra.mxu0 %v659
    %689 = vmatprep.subr.bf16.mxu0 0
    %690 = vmatpush1.bf16.msra.mxu0 %v658
    %691 = vmatprep.subr.bf16.mxu0 0
    %692 = vmatpush1.bf16.msra.mxu0 %v657
    %693 = vmatprep.subr.bf16.mxu0 0
    %694 = vmatpush1.bf16.msra.mxu0 %v656
    %695 = vmatprep.subr.bf16.mxu0 0
    %696 = vmatpush1.bf16.msra.mxu0 %v655
    %697 = vmatprep.subr.bf16.mxu0 0
    %698 = vmatpush1.bf16.msra.mxu0 %v654
    %699 = vmatprep.subr.bf16.mxu0 0
    %700 = vmatpush1.bf16.msra.mxu0 %v653
    %701 = vmatprep.subr.bf16.mxu0 0
    %702 = vmatpush2.bf16.msra.mxu0 %v668
    %703 = vmatprep.subr.bf16.mxu0 0
    %704 = vmatpush2.bf16.msra.mxu0 %v667
    %705 = vmatprep.subr.bf16.mxu0 0
    %706 = vmatpush2.bf16.msra.mxu0 %v666
    %707 = vmatprep.subr.bf16.mxu0 0
    %708 = vmatpush2.bf16.msra.mxu0 %v665
    %709 = vmatprep.subr.bf16.mxu0 0
    %710 = vmatpush2.bf16.msra.mxu0 %v664
    %711 = vmatprep.subr.bf16.mxu0 0
    %712 = vmatpush2.bf16.msra.mxu0 %v663
    %713 = vmatprep.subr.bf16.mxu0 0
    %714 = vmatpush2.bf16.msra.mxu0 %v662
    %715 = vmatprep.subr.bf16.mxu0 0
    %716 = vmatpush2.bf16.msra.mxu0 %v661
    %717 = vmatprep.mubr.bf16.mxu0 %v549
    %718 = vmatmul.mubr.bf16.gmra.mxu0 %v548
    %v719 = vpop.f32.mrf.mxu0
    %v720 = vadd.f32 %v587, %v719
    %v721 = vpop.f32.mrf.mxu0
    %v722 = vpop.f32.mrf.mxu0
    %v723 = vadd.f32 %v587, %v722
    %v724 = vpop.f32.mrf.mxu0
    %725 = vdwg.mxu0
    %vm726 = vcmp.ge.f32.partialorder %v720, 0.0
    %vm727 = vcmp.ge.f32.partialorder %v723, 0.0
    %v728 = vmul.f32 %v720, 0.01
    %v729 = vmul.f32 %v723, 0.01
    %v730 = vsel %vm726, %v720, %v728
    %v731 = vsel %vm727, %v723, %v729
    %v732 = vpack.c.bf16 %v731, %v730
    %v733 = vld [vmem:[#allocation8] sm:$0xf]
    %v734 = vld [vmem:[#allocation8 + $0x4] sm:$0xf]
    %v735 = vld [vmem:[#allocation8 + $0x8] sm:$0xf]
    %v736 = vld [vmem:[#allocation8 + $0xc] sm:$0xf]
    %v737 = vld [vmem:[#allocation8 + $0x10] sm:$0xf]
    %v738 = vld [vmem:[#allocation8 + $0x14] sm:$0xf]
    %v739 = vld [vmem:[#allocation8 + $0x18] sm:$0xf]
    %v740 = vld [vmem:[#allocation8 + $0x1c] sm:$0xf]
    %v741 = vld [vmem:[#allocation8 + $0x20] sm:$0xf]
    %v742 = vld [vmem:[#allocation8 + $0x24] sm:$0xf]
    %v743 = vld [vmem:[#allocation8 + $0x28] sm:$0xf]
    %v744 = vld [vmem:[#allocation8 + $0x2c] sm:$0xf]
    %v745 = vld [vmem:[#allocation8 + $0x30] sm:$0xf]
    %v746 = vld [vmem:[#allocation8 + $0x34] sm:$0xf]
    %v747 = vld [vmem:[#allocation8 + $0x38] sm:$0xf]
    %v748 = vld [vmem:[#allocation8 + $0x3c] sm:$0xf]
    %v749 = vld [vmem:[%s6] sm:$0x1]
    %v751 = vlaneseq
    %v752 = vshrl.u32 %v751, 7
    %v753 = vsub.s32 0, %v752
    %v754 = vrot.slane %v749, %v753
    %v772 = vunpack.c.l.b16 %v733
    %v773 = vunpack.c.l.b16 %v734
    %v774 = vunpack.c.l.b16 %v735
    %v775 = vunpack.c.l.b16 %v736
    %v776 = vunpack.c.l.b16 %v737
    %v777 = vunpack.c.l.b16 %v738
    %v778 = vunpack.c.l.b16 %v739
    %v779 = vunpack.c.l.b16 %v740
    %v780 = vunpack.c.l.b16 %v741
    %v781 = vunpack.c.l.b16 %v742
    %v782 = vunpack.c.l.b16 %v743
    %v783 = vunpack.c.l.b16 %v744
    %v784 = vunpack.c.l.b16 %v745
    %v785 = vunpack.c.l.b16 %v746
    %v786 = vunpack.c.l.b16 %v747
    %v787 = vunpack.c.l.b16 %v748
    %v788 = vpack.c.b16 %v773, %v772
    %v789 = vpack.c.b16 %v775, %v774
    %v790 = vpack.c.b16 %v777, %v776
    %v791 = vpack.c.b16 %v779, %v778
    %v792 = vpack.c.b16 %v781, %v780
    %v793 = vpack.c.b16 %v783, %v782
    %v794 = vpack.c.b16 %v785, %v784
    %v795 = vpack.c.b16 %v787, %v786
    %804 = vmatprep.subr.bf16.mxu0 0
    %805 = vmatpush1.bf16.msra.mxu0 %v795
    %806 = vmatprep.subr.bf16.mxu0 0
    %807 = vmatpush1.bf16.msra.mxu0 %v794
    %808 = vmatprep.subr.bf16.mxu0 0
    %809 = vmatpush1.bf16.msra.mxu0 %v793
    %810 = vmatprep.subr.bf16.mxu0 0
    %811 = vmatpush1.bf16.msra.mxu0 %v792
    %812 = vmatprep.subr.bf16.mxu0 0
    %813 = vmatpush1.bf16.msra.mxu0 %v791
    %814 = vmatprep.subr.bf16.mxu0 0
    %815 = vmatpush1.bf16.msra.mxu0 %v790
    %816 = vmatprep.subr.bf16.mxu0 0
    %817 = vmatpush1.bf16.msra.mxu0 %v789
    %818 = vmatprep.subr.bf16.mxu0 0
    %819 = vmatpush1.bf16.msra.mxu0 %v788
    %820 = vmatprep.subr.bf16.mxu0 0
    %821 = vmatpush2.bf16.msra.mxu0 0
    %822 = vmatprep.subr.bf16.mxu0 0
    %823 = vmatpush2.bf16.msra.mxu0 0
    %824 = vmatprep.subr.bf16.mxu0 0
    %825 = vmatpush2.bf16.msra.mxu0 0
    %826 = vmatprep.subr.bf16.mxu0 0
    %827 = vmatpush2.bf16.msra.mxu0 0
    %828 = vmatprep.subr.bf16.mxu0 0
    %829 = vmatpush2.bf16.msra.mxu0 0
    %830 = vmatprep.subr.bf16.mxu0 0
    %831 = vmatpush2.bf16.msra.mxu0 0
    %832 = vmatprep.subr.bf16.mxu0 0
    %833 = vmatpush2.bf16.msra.mxu0 0
    %834 = vmatprep.subr.bf16.mxu0 0
    %835 = vmatpush2.bf16.msra.mxu0 0
    %836 = vmatprep.mubr.bf16.mxu0 0
    %837 = vmatmul.mubr.bf16.gmra.mxu0 %v732
    %v838 = vpop.f32.mrf.mxu0
    %v839 = vadd.f32 %v754, %v838
    %v840 = vpop.f32.mrf.mxu0
    %v841 = vpop.f32.mrf.mxu0
    %v842 = vadd.f32 %v754, %v841
    %v843 = vpop.f32.mrf.mxu0
    %844 = vdwg.mxu0
    %vm845 = vcmp.ge.f32.partialorder %v839, 0.0
    %vm846 = vcmp.ge.f32.partialorder %v842, 0.0
    %v847 = vmul.f32 %v839, 0.01
    %v848 = vmul.f32 %v842, 0.01
    %v849 = vsel %vm845, %v839, %v847
    %v850 = vsel %vm846, %v842, %v848
    %v851 = vpack.c.bf16 %v850, %v849
    %v852 = vld [vmem:[#allocation10] sm:$0xf]
    %v853 = vld [vmem:[#allocation10 + $0x4] sm:$0xf]
    %v854 = vld [vmem:[#allocation10 + $0x8] sm:$0xf]
    %v855 = vld [vmem:[#allocation10 + $0xc] sm:$0xf]
    %v856 = vld [vmem:[#allocation10 + $0x10] sm:$0xf]
    %v857 = vld [vmem:[#allocation10 + $0x14] sm:$0xf]
    %v858 = vld [vmem:[#allocation10 + $0x18] sm:$0xf]
    %v859 = vld [vmem:[#allocation10 + $0x1c] sm:$0xf]
    %v860 = vld [vmem:[#allocation10 + $0x20] sm:$0xf]
    %v861 = vld [vmem:[#allocation10 + $0x24] sm:$0xf]
    %v862 = vld [vmem:[#allocation10 + $0x28] sm:$0xf]
    %v863 = vld [vmem:[#allocation10 + $0x2c] sm:$0xf]
    %v864 = vld [vmem:[#allocation10 + $0x30] sm:$0xf]
    %v865 = vld [vmem:[#allocation10 + $0x34] sm:$0xf]
    %v866 = vld [vmem:[#allocation10 + $0x38] sm:$0xf]
    %v867 = vld [vmem:[#allocation10 + $0x3c] sm:$0xf]
    %v868 = vld [vmem:[%s8] sm:$0x1]
    %v870 = vlaneseq
    %v871 = vshrl.u32 %v870, 7
    %v872 = vsub.s32 0, %v871
    %v873 = vrot.slane %v868, %v872
    %v891 = vunpack.c.l.b16 %v852
    %v892 = vunpack.c.l.b16 %v853
    %v893 = vunpack.c.l.b16 %v854
    %v894 = vunpack.c.l.b16 %v855
    %v895 = vunpack.c.l.b16 %v856
    %v896 = vunpack.c.l.b16 %v857
    %v897 = vunpack.c.l.b16 %v858
    %v898 = vunpack.c.l.b16 %v859
    %v899 = vunpack.c.l.b16 %v860
    %v900 = vunpack.c.l.b16 %v861
    %v901 = vunpack.c.l.b16 %v862
    %v902 = vunpack.c.l.b16 %v863
    %v903 = vunpack.c.l.b16 %v864
    %v904 = vunpack.c.l.b16 %v865
    %v905 = vunpack.c.l.b16 %v866
    %v906 = vunpack.c.l.b16 %v867
    %v907 = vpack.c.b16 %v892, %v891
    %v908 = vpack.c.b16 %v894, %v893
    %v909 = vpack.c.b16 %v896, %v895
    %v910 = vpack.c.b16 %v898, %v897
    %v911 = vpack.c.b16 %v900, %v899
    %v912 = vpack.c.b16 %v902, %v901
    %v913 = vpack.c.b16 %v904, %v903
    %v914 = vpack.c.b16 %v906, %v905
    %923 = vmatprep.subr.bf16.mxu0 0
    %924 = vmatpush1.bf16.msra.mxu0 %v914
    %925 = vmatprep.subr.bf16.mxu0 0
    %926 = vmatpush1.bf16.msra.mxu0 %v913
    %927 = vmatprep.subr.bf16.mxu0 0
    %928 = vmatpush1.bf16.msra.mxu0 %v912
    %929 = vmatprep.subr.bf16.mxu0 0
    %930 = vmatpush1.bf16.msra.mxu0 %v911
    %931 = vmatprep.subr.bf16.mxu0 0
    %932 = vmatpush1.bf16.msra.mxu0 %v910
    %933 = vmatprep.subr.bf16.mxu0 0
    %934 = vmatpush1.bf16.msra.mxu0 %v909
    %935 = vmatprep.subr.bf16.mxu0 0
    %936 = vmatpush1.bf16.msra.mxu0 %v908
    %937 = vmatprep.subr.bf16.mxu0 0
    %938 = vmatpush1.bf16.msra.mxu0 %v907
    %939 = vmatprep.subr.bf16.mxu0 0
    %940 = vmatpush2.bf16.msra.mxu0 0
    %941 = vmatprep.subr.bf16.mxu0 0
    %942 = vmatpush2.bf16.msra.mxu0 0
    %943 = vmatprep.subr.bf16.mxu0 0
    %944 = vmatpush2.bf16.msra.mxu0 0
    %945 = vmatprep.subr.bf16.mxu0 0
    %946 = vmatpush2.bf16.msra.mxu0 0
    %947 = vmatprep.subr.bf16.mxu0 0
    %948 = vmatpush2.bf16.msra.mxu0 0
    %949 = vmatprep.subr.bf16.mxu0 0
    %950 = vmatpush2.bf16.msra.mxu0 0
    %951 = vmatprep.subr.bf16.mxu0 0
    %952 = vmatpush2.bf16.msra.mxu0 0
    %953 = vmatprep.subr.bf16.mxu0 0
    %954 = vmatpush2.bf16.msra.mxu0 0
    %955 = vmatprep.mubr.bf16.mxu0 0
    %956 = vmatmul.mubr.bf16.gmra.mxu0 %v851
    %v957 = vpop.f32.mrf.mxu0
    %v958 = vadd.f32 %v873, %v957
    %v959 = vpop.f32.mrf.mxu0
    %v960 = vpop.f32.mrf.mxu0
    %v961 = vadd.f32 %v873, %v960
    %v962 = vpop.f32.mrf.mxu0
    %963 = vdwg.mxu0
    %vm964 = vcmp.ge.f32.partialorder %v958, 0.0
    %vm965 = vcmp.ge.f32.partialorder %v961, 0.0
    %v966 = vmul.f32 %v958, 0.01
    %v967 = vmul.f32 %v961, 0.01
    %v968 = vsel %vm964, %v958, %v966
    %v969 = vsel %vm965, %v961, %v967
    %v970 = vpack.c.bf16 %v969, %v968
    %v971 = vld [vmem:[#allocation11] sm:$0xf]
    %v972 = vld [vmem:[#allocation11 + $0x4] sm:$0xf]
    %v973 = vld [vmem:[#allocation11 + $0x8] sm:$0xf]
    %v974 = vld [vmem:[#allocation11 + $0xc] sm:$0xf]
    %v975 = vld [vmem:[#allocation11 + $0x10] sm:$0xf]
    %v976 = vld [vmem:[#allocation11 + $0x14] sm:$0xf]
    %v977 = vld [vmem:[#allocation11 + $0x18] sm:$0xf]
    %v978 = vld [vmem:[#allocation11 + $0x1c] sm:$0xf]
    %v979 = vld [vmem:[#allocation11 + $0x20] sm:$0xf]
    %v980 = vld [vmem:[#allocation11 + $0x24] sm:$0xf]
    %v981 = vld [vmem:[#allocation11 + $0x28] sm:$0xf]
    %v982 = vld [vmem:[#allocation11 + $0x2c] sm:$0xf]
    %v983 = vld [vmem:[#allocation11 + $0x30] sm:$0xf]
    %v984 = vld [vmem:[#allocation11 + $0x34] sm:$0xf]
    %v985 = vld [vmem:[#allocation11 + $0x38] sm:$0xf]
    %v986 = vld [vmem:[#allocation11 + $0x3c] sm:$0xf]
    %v987 = vld [vmem:[%s10] sm:$0x1]
    %v989 = vlaneseq
    %v990 = vshrl.u32 %v989, 7
    %v991 = vsub.s32 0, %v990
    %v992 = vrot.slane %v987, %v991
    %v1010 = vunpack.c.l.b16 %v971
    %v1011 = vunpack.c.l.b16 %v972
    %v1012 = vunpack.c.l.b16 %v973
    %v1013 = vunpack.c.l.b16 %v974
    %v1014 = vunpack.c.l.b16 %v975
    %v1015 = vunpack.c.l.b16 %v976
    %v1016 = vunpack.c.l.b16 %v977
    %v1017 = vunpack.c.l.b16 %v978
    %v1018 = vunpack.c.l.b16 %v979
    %v1019 = vunpack.c.l.b16 %v980
    %v1020 = vunpack.c.l.b16 %v981
    %v1021 = vunpack.c.l.b16 %v982
    %v1022 = vunpack.c.l.b16 %v983
    %v1023 = vunpack.c.l.b16 %v984
    %v1024 = vunpack.c.l.b16 %v985
    %v1025 = vunpack.c.l.b16 %v986
    %v1026 = vpack.c.b16 %v1011, %v1010
    %v1027 = vpack.c.b16 %v1013, %v1012
    %v1028 = vpack.c.b16 %v1015, %v1014
    %v1029 = vpack.c.b16 %v1017, %v1016
    %v1030 = vpack.c.b16 %v1019, %v1018
    %v1031 = vpack.c.b16 %v1021, %v1020
    %v1032 = vpack.c.b16 %v1023, %v1022
    %v1033 = vpack.c.b16 %v1025, %v1024
    %1042 = vmatprep.subr.bf16.mxu0 0
    %1043 = vmatpush1.bf16.msra.mxu0 %v1033
    %1044 = vmatprep.subr.bf16.mxu0 0
    %1045 = vmatpush1.bf16.msra.mxu0 %v1032
    %1046 = vmatprep.subr.bf16.mxu0 0
    %1047 = vmatpush1.bf16.msra.mxu0 %v1031
    %1048 = vmatprep.subr.bf16.mxu0 0
    %1049 = vmatpush1.bf16.msra.mxu0 %v1030
    %1050 = vmatprep.subr.bf16.mxu0 0
    %1051 = vmatpush1.bf16.msra.mxu0 %v1029
    %1052 = vmatprep.subr.bf16.mxu0 0
    %1053 = vmatpush1.bf16.msra.mxu0 %v1028
    %1054 = vmatprep.subr.bf16.mxu0 0
    %1055 = vmatpush1.bf16.msra.mxu0 %v1027
    %1056 = vmatprep.subr.bf16.mxu0 0
    %1057 = vmatpush1.bf16.msra.mxu0 %v1026
    %1058 = vmatprep.subr.bf16.mxu0 0
    %1059 = vmatpush2.bf16.msra.mxu0 0
    %1060 = vmatprep.subr.bf16.mxu0 0
    %1061 = vmatpush2.bf16.msra.mxu0 0
    %1062 = vmatprep.subr.bf16.mxu0 0
    %1063 = vmatpush2.bf16.msra.mxu0 0
    %1064 = vmatprep.subr.bf16.mxu0 0
    %1065 = vmatpush2.bf16.msra.mxu0 0
    %1066 = vmatprep.subr.bf16.mxu0 0
    %1067 = vmatpush2.bf16.msra.mxu0 0
    %1068 = vmatprep.subr.bf16.mxu0 0
    %1069 = vmatpush2.bf16.msra.mxu0 0
    %1070 = vmatprep.subr.bf16.mxu0 0
    %1071 = vmatpush2.bf16.msra.mxu0 0
    %1072 = vmatprep.subr.bf16.mxu0 0
    %1073 = vmatpush2.bf16.msra.mxu0 0
    %1074 = vmatprep.mubr.bf16.mxu0 0
    %1075 = vmatmul.mubr.bf16.gmra.mxu0 %v970
    %v1076 = vpop.f32.mrf.mxu0
    %v1077 = vadd.f32 %v992, %v1076
    %v1078 = vpop.f32.mrf.mxu0
    %v1079 = vpop.f32.mrf.mxu0
    %v1080 = vadd.f32 %v992, %v1079
    %v1081 = vpop.f32.mrf.mxu0
    %1082 = vdwg.mxu0
    %1083 = vmax.xlane.f32.xlu0 %v1077
    %v1084 = vpop.xlane.xlu0 %1083
    %1085 = vmax.xlane.f32.xlu0 %v1080
    %v1086 = vpop.xlane.xlu0 %1085
    %v1087 = vsub.f32 %v1077, %v1084
    %v1088 = vsub.f32 %v1080, %v1086
    %v1089 = vmul.f32 %v1087, 1.442695
    %v1090 = vpow.pop %v1089
    %v1091 = vmul.f32 %v1088, 1.442695
    %v1092 = vpow.pop %v1091
    %1093 = vadd.xlane.f32.xlu0 %v1090
    %v1094 = vpop.xlane.xlu0 %1093
    %1095 = vadd.xlane.f32.xlu0 %v1092
    %v1096 = vpop.xlane.xlu0 %1095
    %v1097 = vrcp.pop %v1094
    %v1098 = vmul.f32 %v1090, %v1097
    %v1099 = vrcp.pop %v1096
    %v1100 = vmul.f32 %v1092, %v1099
    %v1101 = vpack.c.bf16 %v1100, %v1098
    %v1103 = vunpack.c.l.b16 %v1101
    %v1104 = vunpack.c.h.b16 %v1101
    %v1105 = vpack.c.b16 %v1103, %v1103
    %v1106 = vpack.c.b16 %v1104, %v1104
    %1109 = vst [vmem:[#allocation13] sm:$0xf] %v1105
    %1110 = vst [vmem:[#allocation13 + $0x4] sm:$0xf] %v1106
    // Predicated region
    $region70: #{tpu_custom_call.1} parent=1 // pred_check
      _
    $region71: #{tpu_custom_call.1} parent=1 // pred_check_branch
      %1112 = sbr.rel (0) target = $region73
    $region72: #{tpu_custom_call.1} parent=1 // pred_region
      %s1114 = ssub.s32 128, 128
      %1115 = vsyncadd [#allocation4], %s1114
      %s1116 = sshll.u32 [#allocation13], 4
      %s1117 = int_to_ptr.vmem [resolvable:$true] %s1116
      %1122 = dma.vmem_to_hbm [thread:$0]  %s1117, 128, %s11, [#allocation4], 64, 64, 4
    $region73: #{tpu_custom_call.1} parent=1 // pred_fallthru
      _
    // Predicated region
    $region74: #{tpu_custom_call.1} parent=1 // pred_check
      _
    $region75: #{tpu_custom_call.1} parent=1 // pred_check_branch
      %1124 = sbr.rel (0) target = $region77
    $region76: #{tpu_custom_call.1} parent=1 // pred_region
      %1125 = dma.done [#allocation4], 128
    $region77: #{tpu_custom_call.1} parent=1 // pred_fallthru
      _
    %1126 = vsyncpa [#allocation3], 1
    %1127 = vsyncpa [#allocation6], 1
    %1128 = vsyncpa [#allocation9], 1
    %1129 = vsyncpa [#allocation12], 1
    %1130 = vsyncpa [#allocation4], 1

</llo_original>
